<compile_context>
chip_gen: v7x
topology: tpu7x:2x2x1
jax: 0.10.0
libtpu: 0.0.40
codegen_flags: <defaults>
</compile_context>

<pallas_src>
import functools

import jax
import jax.numpy as jnp
import numpy as np
from jax import lax
from jax.experimental import pallas as pl
from jax.experimental.pallas import tpu as pltpu

BN_EPS = 1e-5
_INV_SQRT2 = 0.7071067811865476
_SQRT_2_OVER_PI = 0.7978845608028654
_MiB = 1024 * 1024


# ----------------------------------------------------------------------------
# Kernel
# ----------------------------------------------------------------------------
def _heavy_classifier_kernel(x_ref, wct_ref, bc_ref, wl_ref, bl_ref, o_ref,
                             pooled_ref, *, use_gelu, gelu_approx, cast_x,
                             mxu_dtype, n_pad):
    """Grid = (batch_tiles, hw_tiles); the hw axis is the reduction axis.

    x_ref      : (bt, Cin, hw_t)   input tile, NCHW layout (H*W on lanes)
    wct_ref    : (Hd, Cin)         folded conv weight (BN folded), transposed
    bc_ref     : (Hd, 1)           folded conv + BN bias (column, f32)
    wl_ref     : (Hd, C)           linear weight, pre-scaled by 1/HW (and 1/2)
    bl_ref     : (1, C)            linear bias (row)
    o_ref      : (1, bt, C)        per-batch-tile output block (classes on lanes)
    pooled_ref : (Hd, bt) VMEM     pooled-feature accumulator across hw tiles
    """
    hw_i = pl.program_id(1)

    @pl.when(hw_i == 0)
    def _init():
        pooled_ref[...] = jnp.zeros_like(pooled_ref)

    bt = x_ref.shape[0]
    wct = wct_ref[...]                       # already in the MXU operand dtype
    bc = bc_ref[...]                         # (Hd, 1) f32

    def _act(h):
        if not use_gelu:
            return jnp.maximum(h, 0.0)       # use_hs=False -> ReLU
        if gelu_approx:                      # tanh approximation -> EUP slot
            return 0.5 * h * (1.0 + jnp.tanh(
                _SQRT_2_OVER_PI * (h + 0.044715 * (h * h * h))))
        # exact erf GELU (nn.GELU() default numerics)
        return 0.5 * h * (1.0 + lax.erf(h * _INV_SQRT2))

    def _image_col(b):
        x_b = x_ref[b]                                         # (Cin, hw_t)
        if cast_x:                                             # only force_bf16_mxu
            x_b = x_b.astype(mxu_dtype)
        # 1x1 conv (BN folded): (Hd, Cin) @ (Cin, hw_t) on the MXU, f32 accumulate.
        h = jnp.dot(wct, x_b, preferred_element_type=jnp.float32) + bc
        # Global average pool: spatial sum (1/HW is folded into the linear weight).
        return jnp.sum(_act(h), axis=1, keepdims=True)         # (Hd, 1)

    if bt == 1:
        pooled_ref[...] += _image_col(0)
    else:
        lane_ids = lax.broadcasted_iota(jnp.int32, pooled_ref.shape, 1)

        def body(b, acc):        # fori_loop bounds the live set to ~one h-tensor
            return acc + jnp.where(lane_ids == b, _image_col(b), 0.0)

        pooled_ref[...] += lax.fori_loop(
            0, bt, body, jnp.zeros(pooled_ref.shape, jnp.float32))

    @pl.when(hw_i == pl.num_programs(1) - 1)
    def _finalize():
        pooled = pooled_ref[...]                               # (Hd, bt)
        if n_pad > 0:
            # Zero-padded spatial columns contributed exactly act(bc) each;
            # remove that constant term once.
            pooled = pooled - jnp.float32(n_pad) * _act(bc)
        if bt == 1:
            # (Hd,1)*(Hd,C) broadcast multiply + sublane reduce -> (1, C);
            # avoids any transpose / degenerate matmul.
            out = jnp.sum(pooled * wl_ref[...], axis=0, keepdims=True)
        else:
            # Transpose the tiny pooled buffer via a trans_b MXU matmul with an
            # identity (keeps the output block lane-dense in num_classes).
            eye_bt = jnp.eye(bt, dtype=jnp.float32)
            pooled_t = lax.dot_general(
                eye_bt, pooled, (((1,), (1,)), ((), ())),
                preferred_element_type=jnp.float32)            # (bt, Hd)
            out = jnp.dot(pooled_t, wl_ref[...],
                          preferred_element_type=jnp.float32)  # (bt, C)
        o_ref[0] = (out + bl_ref[...]).astype(o_ref.dtype)


# ----------------------------------------------------------------------------
# Tiling heuristics
# ----------------------------------------------------------------------------
def _choose_batch_tile(batch, cap=8):
    """Images per grid step.  Only divisors of B (no OOB garbage rows), keeping
    >= 2 parallel batch tiles whenever B >= 2 so both v7x TensorCores get work."""
    if batch <= 1:
        # TODO(synk): for B == 1 on v7x, split the H*W reduction across the two
        # TensorCores (two half-sums + a tiny combine pass); single-core for now.
        return 1
    best = 1
    for bt in range(1, min(batch, cap) + 1):
        if batch % bt == 0 and batch // bt >= 2:
            best = bt
    return best


def _vmem_budgets():
    """(vmem_limit_bytes, hw_tile_budget_bytes) per TPU generation."""
    try:
        cap = int(getattr(pltpu.get_tpu_info(), "vmem_capacity_bytes", 0))
    except Exception:  # pragma: no cover - conservative fallback
        cap = 0
    if cap >= 96 * _MiB:                 # v5e / v6e: 128 MiB physical VMEM
        return 96 * _MiB, 40 * _MiB
    return 40 * _MiB, 16 * _MiB          # v7x: 64 MiB physical VMEM


# ----------------------------------------------------------------------------
# pallas_call wrapper
# ----------------------------------------------------------------------------
def _heavy_classifier_pallas(x_nchw, wct, bc_col, wl, bl_row, *,
                             use_gelu, gelu_approx, force_bf16_mxu,
                             hw_tile_budget=None):
    B, Cin, H, W = x_nchw.shape
    HW = H * W
    hd_eff = wct.shape[0]
    num_classes = wl.shape[1]

    # MXU operand dtype follows x (bf16 x halves the dominant HBM stream).  f32 x
    # is only cast in-kernel when explicitly requested (large Cin * hidden_dim).
    if x_nchw.dtype == jnp.bfloat16:
        mxu_dtype, cast_x = jnp.bfloat16, False
    elif force_bf16_mxu:
        mxu_dtype, cast_x = jnp.bfloat16, True
    else:
        mxu_dtype, cast_x = x_nchw.dtype, False
    wct = wct.astype(mxu_dtype)

    x3 = x_nchw.reshape(B, Cin, HW)   # free reshape: stays NCHW (H*W on lanes)

    bt = _choose_batch_tile(B)
    nbt = B // bt

    vmem_limit, auto_budget = _vmem_budgets()
    budget = auto_budget if hw_tile_budget is None else hw_tile_budget

    cin_pad = -(-Cin // 8) * 8
    hd_pad = -(-hd_eff // 8) * 8
    x_item = jnp.dtype(x3.dtype).itemsize
    # Live VMEM per spatial position: double-buffered x tile (held in its HBM
    # dtype) + ~4 live (Hd, hw_t) f32 temporaries (matmul out / activation temps).
    per_pos = 2 * bt * cin_pad * x_item + 4 * hd_pad * 4
    if cast_x:
        per_pos += cin_pad * jnp.dtype(mxu_dtype).itemsize     # bf16 cast copy

    # H*W tiling.  Tiles must be multiples of 128 (or the full axis); pad H*W to
    # a 128 multiple only when we must split a non-aligned axis.  The padded
    # columns' constant activation is subtracted in the kernel's finalize step.
    hw_pad, n_pad = HW, 0
    if HW * per_pos > budget and HW % 128 != 0:
        hw_pad = -(-HW // 128) * 128
        n_pad = hw_pad - HW
        x3 = jnp.pad(x3, ((0, 0), (0, 0), (0, n_pad)))
    if hw_pad * per_pos <= budget:
        hw_t = hw_pad
    else:
        n128 = hw_pad // 128
        k = max(1, min(n128, budget // (128 * per_pos)))
        while n128 % k:
            k -= 1
        hw_t = 128 * k
    nhw = hw_pad // hw_t

    kernel = functools.partial(
        _heavy_classifier_kernel, use_gelu=use_gelu, gelu_approx=gelu_approx,
        cast_x=cast_x, mxu_dtype=mxu_dtype, n_pad=n_pad)

    out3 = pl.pallas_call(
        kernel,
        out_shape=jax.ShapeDtypeStruct((nbt, bt, num_classes), jnp.float32),
        grid_spec=pltpu.PrefetchScalarGridSpec(
            num_scalar_prefetch=0,
            grid=(nbt, nhw),                 # (batch tiles: parallel, HW: reduction)
            in_specs=[
                pl.BlockSpec((bt, Cin, hw_t), lambda b, h: (b, 0, h)),     # x (NCHW)
                # Weight/bias blocks are grid-invariant (constant block index),
                # so they stay resident in VMEM with no per-step DMA churn.
                pl.BlockSpec((hd_eff, Cin), lambda b, h: (0, 0)),          # conv W^T
                pl.BlockSpec((hd_eff, 1), lambda b, h: (0, 0)),            # conv/BN bias
                pl.BlockSpec((hd_eff, num_classes), lambda b, h: (0, 0)),  # linear W (/HW)
                pl.BlockSpec((1, num_classes), lambda b, h: (0, 0)),       # linear bias
            ],
            # Lane-dense output block: num_classes on the lane axis.
            out_specs=pl.BlockSpec((1, bt, num_classes), lambda b, h: (b, 0, 0)),
            scratch_shapes=[pltpu.VMEM((hd_eff, bt), jnp.float32)],
        ),
        compiler_params=pltpu.CompilerParams(
            dimension_semantics=("parallel", "arbitrary"),
            vmem_limit_bytes=vmem_limit,
        ),
    )(x3, wct, bc_col, wl, bl_row)

    return out3.reshape(B, num_classes)


# ----------------------------------------------------------------------------
# Parameter folding + public forward
# ----------------------------------------------------------------------------
def _fold_branch(params, hw, lin_scale=1.0):
    """Fold BatchNorm(eval) into the 1x1-conv weights/bias and the 1/HW pooling
    factor (and optional distillation 1/2) into the linear weights."""
    scale = params["gamma"] * lax.rsqrt(params["var"] + BN_EPS)            # (Hd,)
    wct = (params["w_conv"] * scale[None, :]).T                            # (Hd, Cin)
    bc = (params["b_conv"] - params["mean"]) * scale + params["beta"]      # (Hd,)
    wl = params["w_lin"] * (lin_scale / hw)                                # (Hd, C)
    bl = params["b_lin"] * lin_scale                                       # (C,)
    return wct, bc, wl, bl


def heavy_classifier(x_nchw, params, params_dist=None, distillation=False,
                     use_gelu=True, gelu_approx=False, force_bf16_mxu=False,
                     hw_tile_budget=None):
    """Forward pass matching HeavyClassifier.forward (eval-mode BatchNorm)."""
    # TODO(synk): num_classes <= 0 -> nn.Identity path (module returns x) not implemented.
    B, Cin, H, W = x_nchw.shape
    HW = H * W
    if distillation:
        assert params_dist is not None
        w1, b1, l1, c1 = _fold_branch(params, HW, lin_scale=0.5)
        w2, b2, l2, c2 = _fold_branch(params_dist, HW, lin_scale=0.5)
        # Both branches share x -> fuse into one pallas_call by concatenating
        # along the hidden dimension (x is read from HBM once).
        wct = jnp.concatenate([w1, w2], axis=0)       # (2*Hd, Cin)
        bc = jnp.concatenate([b1, b2], axis=0)        # (2*Hd,)
        wl = jnp.concatenate([l1, l2], axis=0)        # (2*Hd, C)
        bl = c1 + c2                                  # (C,)  == (bl1 + bl2) / 2
    else:
        wct, bc, wl, bl = _fold_branch(params, HW)
    return _heavy_classifier_pallas(
        x_nchw, wct, bc[:, None], wl, bl[None, :],
        use_gelu=use_gelu, gelu_approx=gelu_approx,
        force_bf16_mxu=force_bf16_mxu, hw_tile_budget=hw_tile_budget)


def make_params(key, dim, hidden_dim, num_classes):
    ks = jax.random.split(key, 8)
    return {
        "w_conv": jax.random.normal(ks[0], (dim, hidden_dim), jnp.float32) * 0.1,
        "b_conv": jax.random.normal(ks[1], (hidden_dim,), jnp.float32) * 0.1,
        "gamma": 1.0 + 0.1 * jax.random.normal(ks[2], (hidden_dim,), jnp.float32),
        "beta": 0.1 * jax.random.normal(ks[3], (hidden_dim,), jnp.float32),
        "mean": 0.1 * jax.random.normal(ks[4], (hidden_dim,), jnp.float32),
        "var": 0.5 + jnp.abs(jax.random.normal(ks[5], (hidden_dim,), jnp.float32)),
        "w_lin": jax.random.normal(ks[6], (hidden_dim, num_classes), jnp.float32) * 0.1,
        "b_lin": jax.random.normal(ks[7], (num_classes,), jnp.float32) * 0.1,
    }


# ----------------------------------------------------------------------------
# Pure-JAX reference of the original (unfolded) module math
# ----------------------------------------------------------------------------
def _reference(x_nchw, params, params_dist=None, distillation=False,
               use_gelu=True, gelu_approx=False):
    B, C, H, W = x_nchw.shape
    x = x_nchw.reshape(B, C, H * W)

    def act(h):
        if not use_gelu:
            return jnp.maximum(h, 0.0)
        if gelu_approx:
            return 0.5 * h * (1.0 + jnp.tanh(
                _SQRT_2_OVER_PI * (h + 0.044715 * (h * h * h))))
        return 0.5 * h * (1.0 + lax.erf(h / jnp.sqrt(2.0)))

    def branch(p):
        h = jnp.einsum("bcp,cd->bpd", x, p["w_conv"],
                       precision=lax.Precision.HIGHEST) + p["b_conv"]
        h = (h - p["mean"]) * lax.rsqrt(p["var"] + BN_EPS) * p["gamma"] + p["beta"]
        h = act(h)
        pooled = jnp.mean(h, axis=1)                    # (B, hidden)
        return jnp.dot(pooled, p["w_lin"],
                       precision=lax.Precision.HIGHEST) + p["b_lin"]

    out = branch(params)
    if distillation:
        out = (out + branch(params_dist)) / 2.0
    return out


if __name__ == "__main__":
    dim, hidden_dim, num_classes = 4, 32, 10
    key = jax.random.PRNGKey(0)
    kx, kp, kd = jax.random.split(key, 3)
    params = make_params(kp, dim, hidden_dim, num_classes)
    params_dist = make_params(kd, dim, hidden_dim, num_classes)

    # 1) Single branch, exact GELU, B=2 -> bt=1 (two parallel batch tiles).
    x = jax.random.normal(kx, (2, dim, 16, 16), jnp.float32)
    out = jax.block_until_ready(heavy_classifier(x, params))
    assert out.shape == (2, num_classes)
    ref = _reference(x, params)
    np.testing.assert_allclose(np.asarray(out), np.asarray(ref), rtol=2e-3, atol=2e-3)

    # 2) Fused distillation, B=4 -> bt=2 (exercises the fori_loop batch tile).
    x4 = jax.random.normal(jax.random.PRNGKey(1), (4, dim, 16, 16), jnp.float32)
    out_d = jax.block_until_ready(
        heavy_classifier(x4, params, params_dist, distillation=True))
    ref_d = _reference(x4, params, params_dist, distillation=True)
    np.testing.assert_allclose(np.asarray(out_d), np.asarray(ref_d), rtol=2e-3, atol=2e-3)

    # 3) tanh-approximate GELU path (EUP) against the matching reference.
    out_a = jax.block_until_ready(heavy_classifier(x, params, gelu_approx=True))
    ref_a = _reference(x, params, gelu_approx=True)
    np.testing.assert_allclose(np.asarray(out_a), np.asarray(ref_a), rtol=2e-3, atol=2e-3)

    # 4) ReLU path (use_hs=False).
    out_r = jax.block_until_ready(heavy_classifier(x, params, use_gelu=False))
    ref_r = _reference(x, params, use_gelu=False)
    np.testing.assert_allclose(np.asarray(out_r), np.asarray(ref_r), rtol=2e-3, atol=2e-3)

    # 5) Non-128-aligned H*W forced through the pad + multi-hw-tile reduction path.
    x13 = jax.random.normal(jax.random.PRNGKey(2), (2, dim, 13, 13), jnp.float32)
    out_p = jax.block_until_ready(heavy_classifier(x13, params, hw_tile_budget=1))
    ref_p = _reference(x13, params)
    np.testing.assert_allclose(np.asarray(out_p), np.asarray(ref_p), rtol=2e-3, atol=2e-3)

    print("KERNEL_OK")
</pallas_src>

<mosaic_0001>
module attributes {stable_mosaic.version = 11 : i64} {
  func.func @_heavy_classifier_kernel(%arg0: i32, %arg1: i32, %arg2: memref<1x4x256xf32, #tpu.memory_space<vmem>>, %arg3: memref<32x4xf32, #tpu.memory_space<vmem>>, %arg4: memref<32x1xf32, #tpu.memory_space<vmem>>, %arg5: memref<32x10xf32, #tpu.memory_space<vmem>>, %arg6: memref<1x10xf32, #tpu.memory_space<vmem>>, %arg7: memref<1x1x10xf32, #tpu.memory_space<vmem>>, %arg8: memref<32x1xf32, #tpu.memory_space<vmem>>) attributes {dimension_semantics = [#tpu.dimension_semantics<parallel>, #tpu.dimension_semantics<arbitrary>], iteration_bounds = array<i64: 2, 1>, scalar_prefetch = 0 : i64, scratch_operands = 1 : i64, tpu.core_type = #tpu.core_type<tc>, window_params = [{transform_indices = @transform_0, window_bounds = array<i64: 1, 4, 256>}, {pipeline_mode = #tpu.pipeline_mode<synchronous>, transform_indices = @transform_1, window_bounds = array<i64: 32, 4>}, {pipeline_mode = #tpu.pipeline_mode<synchronous>, transform_indices = @transform_2, window_bounds = array<i64: 32, 1>}, {pipeline_mode = #tpu.pipeline_mode<synchronous>, transform_indices = @transform_3, window_bounds = array<i64: 32, 10>}, {pipeline_mode = #tpu.pipeline_mode<synchronous>, transform_indices = @transform_4, window_bounds = array<i64: 1, 10>}, {transform_indices = @transform_5, window_bounds = array<i64: 1, 1, 10>}]} {
    %c0_i32 = arith.constant 0 : i32
    %0 = arith.cmpi eq, %arg1, %c0_i32 : i32
    %1 = arith.extui %0 : i1 to i32
    %c0_i32_0 = arith.constant 0 : i32
    %2 = arith.cmpi ne, %1, %c0_i32_0 : i32
    scf.if %2 {
      %cst_17 = arith.constant 0.000000e+00 : f32
      %26 = vector.broadcast %cst_17 : f32 to vector<32x1xf32>
      %c0_18 = arith.constant 0 : index
      %c0_19 = arith.constant 0 : index
      %27 = vector.load %arg8[%c0_18, %c0_19] : memref<32x1xf32, #tpu.memory_space<vmem>>, vector<32x1xf32>
      tpu.vector_store %arg8[%c0_18, %c0_19], %26 {strides = array<i32>} : memref<32x1xf32, #tpu.memory_space<vmem>>, vector<32x1xf32>,
    } else {
    }
    %c0 = arith.constant 0 : index
    %c0_1 = arith.constant 0 : index
    %3 = vector.load %arg3[%c0, %c0_1] : memref<32x4xf32, #tpu.memory_space<vmem>>, vector<32x4xf32>
    %c0_2 = arith.constant 0 : index
    %c0_3 = arith.constant 0 : index
    %4 = vector.load %arg4[%c0_2, %c0_3] : memref<32x1xf32, #tpu.memory_space<vmem>>, vector<32x1xf32>
    %c0_4 = arith.constant 0 : index
    %c0_5 = arith.constant 0 : index
    %5 = vector.load %arg8[%c0_4, %c0_5] : memref<32x1xf32, #tpu.memory_space<vmem>>, vector<32x1xf32>
    %c0_6 = arith.constant 0 : index
    %c0_7 = arith.constant 0 : index
    %c0_8 = arith.constant 0 : index
    %6 = vector.load %arg2[%c0_6, %c0_7, %c0_8] : memref<1x4x256xf32, #tpu.memory_space<vmem>>, vector<1x4x256xf32>
    %7 = vector.shape_cast %6 : vector<1x4x256xf32> to vector<4x256xf32>
    %cst = arith.constant dense<0.000000e+00> : vector<32x256xf32>
    %8 = tpu.matmul %3, %7, %cst {dimension_numbers = #tpu.dot_dimension_numbers<[1], [0], [0], [1], [0, 0, 1, 1], [], []>} : vector<32x4xf32>, vector<4x256xf32>, vector<32x256xf32> -> vector<32x256xf32>
    %9 = vector.broadcast %4 : vector<32x1xf32> to vector<32x256xf32>
    %10 = arith.addf %8, %9 : vector<32x256xf32>
    %cst_9 = arith.constant 5.000000e-01 : f32
    %11 = vector.broadcast %cst_9 : f32 to vector<32x256xf32>
    %12 = arith.mulf %11, %10 : vector<32x256xf32>
    %cst_10 = arith.constant 0.707106769 : f32
    %13 = vector.broadcast %cst_10 : f32 to vector<32x256xf32>
    %14 = arith.mulf %10, %13 : vector<32x256xf32>
    %15 = math.erf %14 : vector<32x256xf32>
    %cst_11 = arith.constant 1.000000e+00 : f32
    %16 = vector.broadcast %cst_11 : f32 to vector<32x256xf32>
    %17 = arith.addf %16, %15 : vector<32x256xf32>
    %18 = arith.mulf %12, %17 : vector<32x256xf32>
    %cst_12 = arith.constant dense<0.000000e+00> : vector<32xf32>
    %19 = vector.multi_reduction <add>, %18, %cst_12 [1] : vector<32x256xf32> to vector<32xf32>
    %20 = vector.shape_cast %19 : vector<32xf32> to vector<32x1xf32>
    %21 = arith.addf %5, %20 : vector<32x1xf32>
    %c0_13 = arith.constant 0 : index
    %c0_14 = arith.constant 0 : index
    %22 = vector.load %arg8[%c0_13, %c0_14] : memref<32x1xf32, #tpu.memory_space<vmem>>, vector<32x1xf32>
    tpu.vector_store %arg8[%c0_13, %c0_14], %21 {strides = array<i32>} : memref<32x1xf32, #tpu.memory_space<vmem>>, vector<32x1xf32>,
    %c0_i32_15 = arith.constant 0 : i32
    %23 = arith.cmpi eq, %arg1, %c0_i32_15 : i32
    %24 = arith.extui %23 : i1 to i32
    %c0_i32_16 = arith.constant 0 : i32
    %25 = arith.cmpi ne, %24, %c0_i32_16 : i32
    scf.if %25 {
      %c0_17 = arith.constant 0 : index
      %c0_18 = arith.constant 0 : index
      %26 = vector.load %arg8[%c0_17, %c0_18] : memref<32x1xf32, #tpu.memory_space<vmem>>, vector<32x1xf32>
      %c0_19 = arith.constant 0 : index
      %c0_20 = arith.constant 0 : index
      %27 = vector.load %arg5[%c0_19, %c0_20] : memref<32x10xf32, #tpu.memory_space<vmem>>, vector<32x10xf32>
      %28 = vector.broadcast %26 : vector<32x1xf32> to vector<32x10xf32>
      %29 = arith.mulf %28, %27 : vector<32x10xf32>
      %cst_21 = arith.constant dense<0.000000e+00> : vector<10xf32>
      %30 = vector.multi_reduction <add>, %29, %cst_21 [0] : vector<32x10xf32> to vector<10xf32>
      %31 = vector.shape_cast %30 : vector<10xf32> to vector<1x10xf32>
      %c0_22 = arith.constant 0 : index
      %c0_23 = arith.constant 0 : index
      %32 = vector.load %arg6[%c0_22, %c0_23] : memref<1x10xf32, #tpu.memory_space<vmem>>, vector<1x10xf32>
      %33 = arith.addf %31, %32 : vector<1x10xf32>
      %c0_24 = arith.constant 0 : index
      %c0_25 = arith.constant 0 : index
      %c0_26 = arith.constant 0 : index
      %34 = vector.load %arg7[%c0_24, %c0_25, %c0_26] : memref<1x1x10xf32, #tpu.memory_space<vmem>>, vector<1x1x10xf32>
      %35 = vector.shape_cast %34 : vector<1x1x10xf32> to vector<1x10xf32>
      %36 = vector.shape_cast %33 : vector<1x10xf32> to vector<1x1x10xf32>
      tpu.vector_store %arg7[%c0_24, %c0_25, %c0_26], %36 {strides = array<i32>} : memref<1x1x10xf32, #tpu.memory_space<vmem>>, vector<1x1x10xf32>,
    } else {
    }
    return
  }
  func.func @transform_0(%arg0: i32, %arg1: i32) -> (i32, i32, i32) {
    %c0_i32 = arith.constant 0 : i32
    %c0_i32_0 = arith.constant 0 : i32
    return %arg0, %c0_i32, %arg1 : i32, i32, i32
  }
  func.func @transform_1(%arg0: i32, %arg1: i32) -> (i32, i32) {
    %c0_i32 = arith.constant 0 : i32
    %c0_i32_0 = arith.constant 0 : i32
    %c0_i32_1 = arith.constant 0 : i32
    return %c0_i32, %c0_i32_0 : i32, i32
  }
  func.func @transform_2(%arg0: i32, %arg1: i32) -> (i32, i32) {
    %c0_i32 = arith.constant 0 : i32
    %c0_i32_0 = arith.constant 0 : i32
    %c0_i32_1 = arith.constant 0 : i32
    return %c0_i32, %c0_i32_0 : i32, i32
  }
  func.func @transform_3(%arg0: i32, %arg1: i32) -> (i32, i32) {
    %c0_i32 = arith.constant 0 : i32
    %c0_i32_0 = arith.constant 0 : i32
    %c0_i32_1 = arith.constant 0 : i32
    return %c0_i32, %c0_i32_0 : i32, i32
  }
  func.func @transform_4(%arg0: i32, %arg1: i32) -> (i32, i32) {
    %c0_i32 = arith.constant 0 : i32
    %c0_i32_0 = arith.constant 0 : i32
    %c0_i32_1 = arith.constant 0 : i32
    return %c0_i32, %c0_i32_0 : i32, i32
  }
  func.func @transform_5(%arg0: i32, %arg1: i32) -> (i32, i32, i32) {
    %c0_i32 = arith.constant 0 : i32
    %c0_i32_0 = arith.constant 0 : i32
    %c0_i32_1 = arith.constant 0 : i32
    return %arg0, %c0_i32, %c0_i32_0 : i32, i32, i32
  }
}

</mosaic_0001>

<llo_original>
// kernel: tpu_custom_call.1
$region0: #{tpu_custom_call.1}
  #allocation0 [shape = 'u32[]', space=smem, size = 0x4, offset = 0x4, fixed_abs, tag = 'smem constant byte address 0x4 - core index']
  #allocation1 [shape = 'u32[144,128]{1,0:T(1,128)}', space=vmem, size = 0x12000, scoped, tag = 'internal scratch']
  #allocation2 [shape = 'f32[32,1]{1,0:T(8,128)}', space=vmem, size = 0x4000, scoped, tag = 'scratch operand']
  %s0 = inlined_call_operand.vmem [shape: f32[2,4,256], index: 0, kind: input, shape index: {}]
  %s1 = inlined_call_operand.vmem [shape: f32[32,4], index: 1, kind: input, shape index: {}]
  %s2 = inlined_call_operand.vmem [shape: f32[32,1], index: 2, kind: input, shape index: {}]
  %s3 = inlined_call_operand.vmem [shape: f32[32,10], index: 3, kind: input, shape index: {}]
  %s4 = inlined_call_operand.vmem [shape: f32[1,10], index: 4, kind: input, shape index: {}]
  %s5 = inlined_call_operand.hbm [shape: f32[2,1,10], index: 5, kind: output, shape index: {}]
  %s6 = sld [smem:[#allocation0]]
  $region61: #{tpu_custom_call.1} parent=0
    _
  %s8 = ssub.s32 1, %s6
  %s9 = scalar_select 0, %s8, %s6
  $region1: #{tpu_custom_call.1} parent=0
    #allocation3 [shape = 'u8[1024]{0}', space=vmem, size = 0x400, scoped, tag = 'output window, operand 0']
    #allocation4 [shape = 's32[2]{0}', space=sflag, size = 0x8, scoped, tag = 'scoped memory for tpu_custom_call.1']
    %10 = vsyncpa [#allocation4], 0
    %s11 = scalar_lea.sflag [#allocation4], 1
    %12 = vsyncpa %s11, 0
    loop: start=0, step=1, limit=4
    $region2: #{tpu_custom_call.1} parent=1 // loop_pre_header
      _
    $region3: #{tpu_custom_call.1} parent=1 // loop_header
      %s14 = sphi 0, %s18
      %p15 = scmp.ge.s32.totalorder %s14, 4
      %s21 = sphi 0, %s33
      %s22 = sphi 0, %s29
      %s23 = sphi 0, %s21
      %s24 = sphi 0, %s22
      %s25 = sphi 0, %s23
      %s26 = sphi 0, %s24
      %s38 = sphi 0, %s40
      %s41 = sphi 0, %s38
      %s42 = sphi 0, %s41
      %s58 = sphi 0, %s42
      %s62 = sphi 0, %s62
      %s64 = sphi 0, %s62
      %s65 = sphi 0, %s64
      %s79 = sphi 0, %s65
      %s83 = sphi 0, %s83
      %s85 = sphi 0, %s83
      %s86 = sphi 0, %s85
      %s100 = sphi 0, %s86
      %s104 = sphi 0, %s104
      %s106 = sphi 0, %s104
      %s107 = sphi 0, %s106
      %s121 = sphi 0, %s107
      %s125 = sphi 0, %s125
      %s127 = sphi 0, %s125
      %s128 = sphi 0, %s127
      %s142 = sphi 0, %s128
      %s148 = sphi 0, %s150
      %s151 = sphi 0, %s148
      %s152 = sphi 0, %s151
      %s168 = sphi 0, %s152
    $region4: #{tpu_custom_call.1} parent=1 // loop_header_branch
      %17 = sbr.rel (%p15) target = $region8
    $region5: #{tpu_custom_call.1} parent=1 // loop_body
      %s19 = ssub.s32 %s14, 1
      %s20 = ssub.s32 %s14, 2
      %s27 = sadd.s32 1, %s22
      %p28 = scmp.ge.s32.totalorder %s27, 1
      %s29 = scalar_select %p28, 0, %s27
      %s30 = sadd.s32 1, %s21
      %s31 = scalar_select %p28, %s30, %s21
      %p32 = scmp.ge.s32.totalorder %s31, 2
      %s33 = scalar_select %p32, 0, %s31
      %s34 = ssub.s32 %s21, %s33
      %s35 = ssub.s32 %s22, %s29
      %s36 = sor.u32 %s34, %s35
      %p37 = scmp.eq.s32.totalorder %s36, 0
      %s39 = sadd.s32 %s38, 1
      %s40 = scalar_select %p37, %s38, %s39
      %p43 = pneg %p37
      %p44 = scmp.eq.s32.totalorder %s14, 1
      %p45 = por %p43, %p44
      %p46 = scmp.ne.s32.totalorder %s38, %s41
      %p47 = scmp.eq.s32.totalorder %s14, 0
      %p48 = por %p46, %p47
      %p49 = scmp.ne.s32.totalorder %s38, %s41
      %p50 = scmp.eq.s32.totalorder %s19, 1
      %p51 = por %p49, %p50
      %p52 = scmp.ne.s32.totalorder %s41, %s42
      %p53 = scmp.eq.s32.totalorder %s19, 0
      %p54 = por %p52, %p53
      %p55 = scmp.ne.s32.totalorder %s41, %s42
      %p56 = scmp.eq.s32.totalorder %s20, 1
      %p57 = por %p55, %p56
      %p59 = scmp.ne.s32.totalorder %s42, %s58
      %p60 = scmp.eq.s32.totalorder %s20, 0
      %p61 = por %p59, %p60
      %s63 = sadd.s32 %s62, 1
      %p66 = scmp.eq.s32.totalorder %s14, 1
      %p67 = scmp.ne.s32.totalorder %s62, %s64
      %p68 = scmp.eq.s32.totalorder %s14, 0
      %p69 = por %p67, %p68
      %p70 = scmp.ne.s32.totalorder %s62, %s64
      %p71 = scmp.eq.s32.totalorder %s19, 1
      %p72 = por %p70, %p71
      %p73 = scmp.ne.s32.totalorder %s64, %s65
      %p74 = scmp.eq.s32.totalorder %s19, 0
      %p75 = por %p73, %p74
      %p76 = scmp.ne.s32.totalorder %s64, %s65
      %p77 = scmp.eq.s32.totalorder %s20, 1
      %p78 = por %p76, %p77
      %p80 = scmp.ne.s32.totalorder %s65, %s79
      %p81 = scmp.eq.s32.totalorder %s20, 0
      %p82 = por %p80, %p81
      %s84 = sadd.s32 %s83, 1
      %p87 = scmp.eq.s32.totalorder %s14, 1
      %p88 = scmp.ne.s32.totalorder %s83, %s85
      %p89 = scmp.eq.s32.totalorder %s14, 0
      %p90 = por %p88, %p89
      %p91 = scmp.ne.s32.totalorder %s83, %s85
      %p92 = scmp.eq.s32.totalorder %s19, 1
      %p93 = por %p91, %p92
      %p94 = scmp.ne.s32.totalorder %s85, %s86
      %p95 = scmp.eq.s32.totalorder %s19, 0
      %p96 = por %p94, %p95
      %p97 = scmp.ne.s32.totalorder %s85, %s86
      %p98 = scmp.eq.s32.totalorder %s20, 1
      %p99 = por %p97, %p98
      %p101 = scmp.ne.s32.totalorder %s86, %s100
      %p102 = scmp.eq.s32.totalorder %s20, 0
      %p103 = por %p101, %p102
      %s105 = sadd.s32 %s104, 1
      %p108 = scmp.eq.s32.totalorder %s14, 1
      %p109 = scmp.ne.s32.totalorder %s104, %s106
      %p110 = scmp.eq.s32.totalorder %s14, 0
      %p111 = por %p109, %p110
      %p112 = scmp.ne.s32.totalorder %s104, %s106
      %p113 = scmp.eq.s32.totalorder %s19, 1
      %p114 = por %p112, %p113
      %p115 = scmp.ne.s32.totalorder %s106, %s107
      %p116 = scmp.eq.s32.totalorder %s19, 0
      %p117 = por %p115, %p116
      %p118 = scmp.ne.s32.totalorder %s106, %s107
      %p119 = scmp.eq.s32.totalorder %s20, 1
      %p120 = por %p118, %p119
      %p122 = scmp.ne.s32.totalorder %s107, %s121
      %p123 = scmp.eq.s32.totalorder %s20, 0
      %p124 = por %p122, %p123
      %s126 = sadd.s32 %s125, 1
      %p129 = scmp.eq.s32.totalorder %s14, 1
      %p130 = scmp.ne.s32.totalorder %s125, %s127
      %p131 = scmp.eq.s32.totalorder %s14, 0
      %p132 = por %p130, %p131
      %p133 = scmp.ne.s32.totalorder %s125, %s127
      %p134 = scmp.eq.s32.totalorder %s19, 1
      %p135 = por %p133, %p134
      %p136 = scmp.ne.s32.totalorder %s127, %s128
      %p137 = scmp.eq.s32.totalorder %s19, 0
      %p138 = por %p136, %p137
      %p139 = scmp.ne.s32.totalorder %s127, %s128
      %p140 = scmp.eq.s32.totalorder %s20, 1
      %p141 = por %p139, %p140
      %p143 = scmp.ne.s32.totalorder %s128, %s142
      %p144 = scmp.eq.s32.totalorder %s20, 0
      %p145 = por %p143, %p144
      %s146 = ssub.s32 %s21, %s33
      %p147 = scmp.eq.s32.totalorder %s146, 0
      %s149 = sadd.s32 %s148, 1
      %s150 = scalar_select %p147, %s148, %s149
      %p153 = pneg %p147
      %p154 = scmp.eq.s32.totalorder %s14, 1
      %p155 = por %p153, %p154
      %p156 = scmp.ne.s32.totalorder %s148, %s151
      %p157 = scmp.eq.s32.totalorder %s14, 0
      %p158 = por %p156, %p157
      %p159 = scmp.ne.s32.totalorder %s148, %s151
      %p160 = scmp.eq.s32.totalorder %s19, 1
      %p161 = por %p159, %p160
      %p162 = scmp.ne.s32.totalorder %s151, %s152
      %p163 = scmp.eq.s32.totalorder %s19, 0
      %p164 = por %p162, %p163
      %p165 = scmp.ne.s32.totalorder %s151, %s152
      %p166 = scmp.eq.s32.totalorder %s20, 1
      %p167 = por %p165, %p166
      %p169 = scmp.ne.s32.totalorder %s152, %s168
      %p170 = scmp.eq.s32.totalorder %s20, 0
      %p171 = por %p169, %p170
      %p172 = scmp.le.s32.totalorder 1, %s14
      %p173 = scmp.lt.s32.totalorder %s14, 3
      %p174 = pnand %p172, %p173
      %p175 = pneg %p174
      // Predicated region
      $region9: #{tpu_custom_call.1} parent=5 // pred_check
        _
      $region10: #{tpu_custom_call.1} parent=5 // pred_check_branch
        %177 = sbr.rel (%p174) target = $region12
      $region11: #{tpu_custom_call.1} parent=5 // pred_region
        %s178 = ssub.s32 %s14, 1
        // Predicated region
        $region13: #{tpu_custom_call.1} parent=11 // pred_check
          %p179 = pneg %p75
        $region14: #{tpu_custom_call.1} parent=11 // pred_check_branch
          %181 = sbr.rel (%p179) target = $region16
        $region15: #{tpu_custom_call.1} parent=11 // pred_region
          _
        $region16: #{tpu_custom_call.1} parent=11 // pred_fallthru
          _
        // Predicated region
        $region17: #{tpu_custom_call.1} parent=11 // pred_check
          %p182 = pneg %p96
        $region18: #{tpu_custom_call.1} parent=11 // pred_check_branch
          %184 = sbr.rel (%p182) target = $region20
        $region19: #{tpu_custom_call.1} parent=11 // pred_region
          _
        $region20: #{tpu_custom_call.1} parent=11 // pred_fallthru
          _
        // Predicated region
        $region21: #{tpu_custom_call.1} parent=11 // pred_check
          %p185 = pneg %p117
        $region22: #{tpu_custom_call.1} parent=11 // pred_check_branch
          %187 = sbr.rel (%p185) target = $region24
        $region23: #{tpu_custom_call.1} parent=11 // pred_region
          _
        $region24: #{tpu_custom_call.1} parent=11 // pred_fallthru
          _
        // Predicated region
        $region25: #{tpu_custom_call.1} parent=11 // pred_check
          %p188 = pneg %p138
        $region26: #{tpu_custom_call.1} parent=11 // pred_check_branch
          %190 = sbr.rel (%p188) target = $region28
        $region27: #{tpu_custom_call.1} parent=11 // pred_region
          _
        $region28: #{tpu_custom_call.1} parent=11 // pred_fallthru
          _
      $region12: #{tpu_custom_call.1} parent=5 // pred_fallthru
        _
      %p191 = scmp.lt.s32.totalorder %s14, 2
      // Predicated region
      $region29: #{tpu_custom_call.1} parent=5 // pred_check
        %p192 = pneg %p191
      $region30: #{tpu_custom_call.1} parent=5 // pred_check_branch
        %194 = sbr.rel (%p192) target = $region32
      $region31: #{tpu_custom_call.1} parent=5 // pred_region
        // Predicated region
        $region33: #{tpu_custom_call.1} parent=31 // pred_check
          %p195 = pneg %p48
        $region34: #{tpu_custom_call.1} parent=31 // pred_check_branch
          %197 = sbr.rel (%p195) target = $region36
        $region35: #{tpu_custom_call.1} parent=31 // pred_region
          %s198 = smul.u32 2, %s22
          %p199 = scmp.lt.s32.totalorder %s21, 1
          %s200 = scalar_select %p199, %s21, 1
          %p201 = scmp.lt.s32.totalorder %s198, 1
          %s202 = scalar_select %p201, %s198, 1
          %s203 = smul.addr %s200, 2
          %s204 = sadd.s32 %s202, %s203
          %s205 = smul.addr %s204, 4
          %s206 = scalar_lea.vmem %s0, %s205
          %s207 = smul.u32 2, %s22
        $region36: #{tpu_custom_call.1} parent=31 // pred_fallthru
          _
      $region32: #{tpu_custom_call.1} parent=5 // pred_fallthru
        _
      %p208 = scmp.le.s32.totalorder 1, %s14
      %p209 = scmp.lt.s32.totalorder %s14, 3
      %p210 = pnand %p208, %p209
      %p211 = pneg %p210
      // Predicated region
      $region37: #{tpu_custom_call.1} parent=5 // pred_check
        _
      $region38: #{tpu_custom_call.1} parent=5 // pred_check_branch
        %213 = sbr.rel (%p210) target = $region40
      $region39: #{tpu_custom_call.1} parent=5 // pred_region
        %s214 = ssub.s32 %s14, 1
        %s215 = smul.u32 2, %s24
        %p216 = scmp.lt.s32.totalorder %s23, 1
        %s217 = scalar_select %p216, %s23, 1
        %p218 = scmp.lt.s32.totalorder %s215, 1
        %s219 = scalar_select %p218, %s215, 1
        %s220 = smul.addr %s217, 2
        %s221 = sadd.s32 %s219, %s220
        %s222 = smul.addr %s221, 4
        %s223 = scalar_lea.vmem %s0, %s222
        %p224 = pneg %p54
        %p225 = pneg %p51
        %p226 = pneg %p75
        %p227 = pneg %p72
        %p228 = pneg %p96
        %p229 = pneg %p93
        %p230 = pneg %p117
        %p231 = pneg %p114
        %p232 = pneg %p138
        %p233 = pneg %p135
        %p234 = pneg %p164
        %p235 = pneg %p161
        %s236 = sand.u32 %s151, 1
        %s237 = scalar_lea.sflag [#allocation4], %s236
        %s238 = sand.u32 %s151, 1
        %s239 = scalar_lea.vmem [#allocation3], %s238
        %s240 = smul.u32 2, %s24
        %p241 = scmp.lt.s32.totalorder %s23, 1
        %s242 = scalar_select %p241, %s23, 1
        %p243 = scmp.lt.s32.totalorder %s240, 1
        %s244 = scalar_select %p243, %s240, 1
        %s245 = smul.addr %s242, 2
        %s246 = sadd.s32 %s244, %s245
        %s247 = smul.addr %s246, 4
        %s248 = scalar_lea.vmem %s0, %s247
        %s249 = smul.u32 2, %s24
        %p250 = scmp.eq.s32.totalorder %s24, 0
        // Predicated region
        $region41: #{tpu_custom_call.1} parent=39 // pred_check
          %p251 = pneg %p250
        $region42: #{tpu_custom_call.1} parent=39 // pred_check_branch
          %253 = sbr.rel (%p251) target = $region44
        $region43: #{tpu_custom_call.1} parent=39 // pred_region
          %vm254 = vcmask 7168
          %255 = vst.msk [vmem:[#allocation2] sm:$0xff] %vm254, 0.0
          %256 = vst.msk [vmem:[#allocation2 + $0x8] sm:$0xff] %vm254, 0.0
          %257 = vst.msk [vmem:[#allocation2 + $0x10] sm:$0xff] %vm254, 0.0
          %258 = vst.msk [vmem:[#allocation2 + $0x18] sm:$0xff] %vm254, 0.0
        $region44: #{tpu_custom_call.1} parent=39 // pred_fallthru
          _
        %v259 = vld [vmem:[%s1] sm:$0xff]
        %v260 = vld [vmem:[%s1 + $0x8] sm:$0xff]
        %v261 = vld [vmem:[%s1 + $0x10] sm:$0xff]
        %v262 = vld [vmem:[%s1 + $0x18] sm:$0xff]
        %v263 = vld [vmem:[%s2] sm:$0xff]
        %v264 = vld [vmem:[%s2 + $0x8] sm:$0xff]
        %v265 = vld [vmem:[%s2 + $0x10] sm:$0xff]
        %v266 = vld [vmem:[%s2 + $0x18] sm:$0xff]
        %v267 = vld [vmem:[#allocation2] sm:$0xff]
        %v268 = vld [vmem:[#allocation2 + $0x8] sm:$0xff]
        %v269 = vld [vmem:[#allocation2 + $0x10] sm:$0xff]
        %v270 = vld [vmem:[#allocation2 + $0x18] sm:$0xff]
        %v271 = vld [vmem:[%s248] sm:$0xff]
        %273 = vset.pattern.permute.xlu0 0
        %274 = vperm.xlu0 %273, %v263
        %v275 = vpop.permute.xlu0 %274
        %278 = vset.pattern.permute.xlu0 0
        %279 = vperm.xlu0 %278, %v264
        %v280 = vpop.permute.xlu0 %279
        %283 = vset.pattern.permute.xlu0 0
        %284 = vperm.xlu0 %283, %v265
        %v285 = vpop.permute.xlu0 %284
        %288 = vset.pattern.permute.xlu0 0
        %289 = vperm.xlu0 %288, %v266
        %v290 = vpop.permute.xlu0 %289
        %v293 = vcombine.high %v271, %v271
        %vm294 = vcmask 31744
        %v296 = vsel %vm294, %v259, 0
        %v299 = vsel %vm294, %v260, 0
        %v302 = vsel %vm294, %v261, 0
        %v305 = vsel %vm294, %v262, 0
        %vm307 = vcmask 1043456
        %v308 = vsel %vm307, %v271, 0
        %v310 = vsel %vm307, %v293, 0
        %312 = vmatprep.subr.mxu0 %v310
        %313 = vmatpush1.msra.mxu0 %v308
        %314 = vmatprep.subr.mxu0 0.0
        %315 = vmatpush1.msra.mxu0 0.0
        %316 = vmatprep.subr.mxu0 0.0
        %317 = vmatpush1.msra.mxu0 0.0
        %318 = vmatprep.subr.mxu0 0.0
        %319 = vmatpush1.msra.mxu0 0.0
        %320 = vmatprep.subr.mxu0 0.0
        %321 = vmatpush1.msra.mxu0 0.0
        %322 = vmatprep.subr.mxu0 0.0
        %323 = vmatpush1.msra.mxu0 0.0
        %324 = vmatprep.subr.mxu0 0.0
        %325 = vmatpush1.msra.mxu0 0.0
        %326 = vmatprep.subr.mxu0 0.0
        %327 = vmatpush1.msra.mxu0 0.0
        %328 = vmatprep.subr.mxu0 0.0
        %329 = vmatpush1.msra.mxu0 0.0
        %330 = vmatprep.subr.mxu0 0.0
        %331 = vmatpush1.msra.mxu0 0.0
        %332 = vmatprep.subr.mxu0 0.0
        %333 = vmatpush1.msra.mxu0 0.0
        %334 = vmatprep.subr.mxu0 0.0
        %335 = vmatpush1.msra.mxu0 0.0
        %336 = vmatprep.subr.mxu0 0.0
        %337 = vmatpush1.msra.mxu0 0.0
        %338 = vmatprep.subr.mxu0 0.0
        %339 = vmatpush1.msra.mxu0 0.0
        %340 = vmatprep.subr.mxu0 0.0
        %341 = vmatpush1.msra.mxu0 0.0
        %342 = vmatprep.subr.mxu0 0.0
        %343 = vmatpush1.msra.mxu0 0.0
        %344 = vmatprep.subr.mxu0 0.0
        %345 = vmatpush1.msra.mxu0 0.0
        %346 = vmatprep.subr.mxu0 0.0
        %347 = vmatpush1.msra.mxu0 0.0
        %348 = vmatprep.subr.mxu0 0.0
        %349 = vmatpush1.msra.mxu0 0.0
        %350 = vmatprep.subr.mxu0 0.0
        %351 = vmatpush1.msra.mxu0 0.0
        %352 = vmatprep.subr.mxu0 0.0
        %353 = vmatpush1.msra.mxu0 0.0
        %354 = vmatprep.subr.mxu0 0.0
        %355 = vmatpush1.msra.mxu0 0.0
        %356 = vmatprep.subr.mxu0 0.0
        %357 = vmatpush1.msra.mxu0 0.0
        %358 = vmatprep.subr.mxu0 0.0
        %359 = vmatpush1.msra.mxu0 0.0
        %360 = vmatprep.subr.mxu0 0.0
        %361 = vmatpush1.msra.mxu0 0.0
        %362 = vmatprep.subr.mxu0 0.0
        %363 = vmatpush1.msra.mxu0 0.0
        %364 = vmatprep.subr.mxu0 0.0
        %365 = vmatpush1.msra.mxu0 0.0
        %366 = vmatprep.subr.mxu0 0.0
        %367 = vmatpush1.msra.mxu0 0.0
        %368 = vmatprep.subr.mxu0 0.0
        %369 = vmatpush1.msra.mxu0 0.0
        %370 = vmatprep.subr.mxu0 0.0
        %371 = vmatpush1.msra.mxu0 0.0
        %372 = vmatprep.subr.mxu0 0.0
        %373 = vmatpush1.msra.mxu0 0.0
        %374 = vmatprep.subr.mxu0 0.0
        %375 = vmatpush1.msra.mxu0 0.0
        %376 = vmatprep.mubr.f32.mxu0 0.0
        %377 = vmatmul.mubr.f32.gmra.mrb[0].mxu0 %v296
        %v378 = vpop.f32.mrb[0].mxu0
        %v379 = vadd.f32 %v275, %v378
        %v380 = vpop.f32.mrb[0].mxu0
        %v381 = vadd.f32 %v275, %v380
        %382 = vmatprep.mubr.f32.mxu0 0.0
        %383 = vmatmul.mubr.f32.gmra.mrb[0].mxu0 %v299
        %v384 = vpop.f32.mrb[0].mxu0
        %v385 = vadd.f32 %v280, %v384
        %v386 = vpop.f32.mrb[0].mxu0
        %v387 = vadd.f32 %v280, %v386
        %388 = vmatprep.mubr.f32.mxu0 0.0
        %389 = vmatmul.mubr.f32.gmra.mrb[0].mxu0 %v302
        %v390 = vpop.f32.mrb[0].mxu0
        %v391 = vadd.f32 %v285, %v390
        %v392 = vpop.f32.mrb[0].mxu0
        %v393 = vadd.f32 %v285, %v392
        %394 = vmatprep.mubr.f32.mxu0 0.0
        %395 = vmatmul.mubr.f32.gmra.mrb[0].mxu0 %v305
        %v396 = vpop.f32.mrb[0].mxu0
        %v397 = vadd.f32 %v290, %v396
        %v398 = vpop.f32.mrb[0].mxu0
        %v399 = vadd.f32 %v290, %v398
        %400 = vdwg.mxu0
        %v401 = vmul.f32 %v379, 0.5
        %v402 = vmul.f32 %v381, 0.5
        %v403 = vmul.f32 %v385, 0.5
        %v404 = vmul.f32 %v387, 0.5
        %v405 = vmul.f32 %v391, 0.5
        %v406 = vmul.f32 %v393, 0.5
        %v407 = vmul.f32 %v397, 0.5
        %v408 = vmul.f32 %v399, 0.5
        %v409 = vmul.f32 %v379, 0.70710677
        %v410 = vmul.f32 %v381, 0.70710677
        %v411 = vmul.f32 %v385, 0.70710677
        %v412 = vmul.f32 %v387, 0.70710677
        %v413 = vmul.f32 %v391, 0.70710677
        %v414 = vmul.f32 %v393, 0.70710677
        %v415 = vmul.f32 %v397, 0.70710677
        %v416 = vmul.f32 %v399, 0.70710677
        %v417 = verf.f32.pop %v409
        %v418 = verf.f32.pop %v410
        %v419 = verf.f32.pop %v411
        %v420 = verf.f32.pop %v412
        %v421 = verf.f32.pop %v413
        %v422 = verf.f32.pop %v414
        %v423 = verf.f32.pop %v415
        %v424 = verf.f32.pop %v416
        %v425 = vadd.f32 %v417, 1.0
        %v426 = vadd.f32 %v418, 1.0
        %v427 = vadd.f32 %v419, 1.0
        %v428 = vadd.f32 %v420, 1.0
        %v429 = vadd.f32 %v421, 1.0
        %v430 = vadd.f32 %v422, 1.0
        %v431 = vadd.f32 %v423, 1.0
        %v432 = vadd.f32 %v424, 1.0
        %v433 = vmul.f32 %v401, %v425
        %v434 = vmul.f32 %v402, %v426
        %v435 = vmul.f32 %v403, %v427
        %v436 = vmul.f32 %v404, %v428
        %v437 = vmul.f32 %v405, %v429
        %v438 = vmul.f32 %v406, %v430
        %v439 = vmul.f32 %v407, %v431
        %v440 = vmul.f32 %v408, %v432
        %v441 = vadd.f32 %v433, %v434
        %442 = vadd.xlane.f32.xlu0 %v441
        %v443 = vpop.xlane.xlu0 %442
        %v444 = vadd.f32 %v435, %v436
        %445 = vadd.xlane.f32.xlu0 %v444
        %v446 = vpop.xlane.xlu0 %445
        %v447 = vadd.f32 %v437, %v438
        %448 = vadd.xlane.f32.xlu0 %v447
        %v449 = vpop.xlane.xlu0 %448
        %v450 = vadd.f32 %v439, %v440
        %451 = vadd.xlane.f32.xlu0 %v450
        %v452 = vpop.xlane.xlu0 %451
        %v453 = vadd.f32 %v267, %v443
        %v454 = vadd.f32 %v268, %v446
        %v455 = vadd.f32 %v269, %v449
        %v456 = vadd.f32 %v270, %v452
        %vm457 = vcmask 7168
        %458 = vst.msk [vmem:[#allocation2] sm:$0xff] %vm457, %v453
        %459 = vst.msk [vmem:[#allocation2 + $0x8] sm:$0xff] %vm457, %v454
        %460 = vst.msk [vmem:[#allocation2 + $0x10] sm:$0xff] %vm457, %v455
        %461 = vst.msk [vmem:[#allocation2 + $0x18] sm:$0xff] %vm457, %v456
        // Predicated region
        $region45: #{tpu_custom_call.1} parent=39 // pred_check
          %p462 = pneg %p250
        $region46: #{tpu_custom_call.1} parent=39 // pred_check_branch
          %464 = sbr.rel (%p462) target = $region48
        $region47: #{tpu_custom_call.1} parent=39 // pred_region
          %v465 = vld [vmem:[#allocation2] sm:$0xff]
          %v466 = vld [vmem:[#allocation2 + $0x8] sm:$0xff]
          %v467 = vld [vmem:[#allocation2 + $0x10] sm:$0xff]
          %v468 = vld [vmem:[#allocation2 + $0x18] sm:$0xff]
          %v469 = vld [vmem:[%s3] sm:$0xff]
          %v470 = vld [vmem:[%s3 + $0x8] sm:$0xff]
          %v471 = vld [vmem:[%s3 + $0x10] sm:$0xff]
          %v472 = vld [vmem:[%s3 + $0x18] sm:$0xff]
          %474 = vset.pattern.permute.xlu0 0
          %475 = vperm.xlu0 %474, %v465
          %v476 = vpop.permute.xlu0 %475
          %479 = vset.pattern.permute.xlu0 0
          %480 = vperm.xlu0 %479, %v466
          %v481 = vpop.permute.xlu0 %480
          %484 = vset.pattern.permute.xlu0 0
          %485 = vperm.xlu0 %484, %v467
          %v486 = vpop.permute.xlu0 %485
          %489 = vset.pattern.permute.xlu0 0
          %490 = vperm.xlu0 %489, %v468
          %v491 = vpop.permute.xlu0 %490
          %v493 = vmul.f32 %v476, %v469
          %v494 = vmul.f32 %v481, %v470
          %v495 = vmul.f32 %v486, %v471
          %v496 = vmul.f32 %v491, %v472
          %vm497 = vcmask 80896
          %v498 = vsel %vm497, %v493, 0.0
          %v499 = vsel %vm497, %v494, 0.0
          %v500 = vadd.f32 %v498, %v499
          %v501 = vsel %vm497, %v495, 0.0
          %v502 = vadd.f32 %v500, %v501
          %v503 = vsel %vm497, %v496, 0.0
          %v504 = vadd.f32 %v502, %v503
          %v505 = vrot.slane %v504, 4
          %v506 = vadd.f32 %v504, %v505
          %v507 = vrot.slane %v506, 2
          %v508 = vadd.f32 %v506, %v507
          %v509 = vrot.slane %v508, 1
          %v510 = vadd.f32 %v508, %v509
          %v511 = vld [vmem:[%s4] sm:$0x1]
          %v512 = vadd.f32 %v510, %v511
          %vm513 = vcmask 73728
          %514 = vst.msk [vmem:[%s239] sm:$0x1] %vm513, %v512
        $region48: #{tpu_custom_call.1} parent=39 // pred_fallthru
          _
        %s515 = sand.u32 %s151, 1
        %s516 = scalar_lea.sflag [#allocation4], %s515
        %s517 = sand.u32 %s151, 1
        %s518 = scalar_lea.vmem [#allocation3], %s517
        // Predicated region
        $region49: #{tpu_custom_call.1} parent=39 // pred_check
          %p519 = pneg %p161
        $region50: #{tpu_custom_call.1} parent=39 // pred_check_branch
          %521 = sbr.rel (%p519) target = $region52
        $region51: #{tpu_custom_call.1} parent=39 // pred_region
          %s523 = ssub.s32 16, 16
          %524 = vsyncadd %s516, %s523
          %s525 = smul.addr %s23, 16
          %s526 = scalar_lea.hbm %s5, %s525
          %s528 = sshll.u32 %s518, 4
          %s529 = int_to_ptr.vmem [resolvable:$true] %s528
          %531 = dma.vmem_to_hbm [thread:$0]  %s529, 16, %s526, %s516
        $region52: #{tpu_custom_call.1} parent=39 // pred_fallthru
          _
      $region40: #{tpu_custom_call.1} parent=5 // pred_fallthru
        _
      %p532 = scmp.le.s32.totalorder 2, %s14
      // Predicated region
      $region53: #{tpu_custom_call.1} parent=5 // pred_check
        %p533 = pneg %p532
      $region54: #{tpu_custom_call.1} parent=5 // pred_check_branch
        %535 = sbr.rel (%p533) target = $region56
      $region55: #{tpu_custom_call.1} parent=5 // pred_region
        %s536 = ssub.s32 %s14, 2
        // Predicated region
        $region57: #{tpu_custom_call.1} parent=55 // pred_check
          %p537 = pneg %p167
        $region58: #{tpu_custom_call.1} parent=55 // pred_check_branch
          %539 = sbr.rel (%p537) target = $region60
        $region59: #{tpu_custom_call.1} parent=55 // pred_region
          %s540 = sand.u32 %s152, 1
          %s541 = scalar_lea.sflag [#allocation4], %s540
          %s542 = sand.u32 %s152, 1
          %s543 = scalar_lea.vmem [#allocation3], %s542
          %544 = dma.done %s541, 16
        $region60: #{tpu_custom_call.1} parent=55 // pred_fallthru
          _
      $region56: #{tpu_custom_call.1} parent=5 // pred_fallthru
        _
    $region6: #{tpu_custom_call.1} parent=1 // loop_footer
      %s18 = sadd.s32 1, %s14
    $region7: #{tpu_custom_call.1} parent=1 // loop_footer_branch
      %13 = sbr.rel target = $region3
    $region8: #{tpu_custom_call.1} parent=1 // loop_exit
      _
    %545 = vsyncpa [#allocation4], 1
    %s546 = scalar_lea.sflag [#allocation4], 1
    %547 = vsyncpa %s546, 1

</llo_original>
